<compile_context>
chip_gen: v5e
topology: v5e:2x2
jax: 0.10.0
libtpu: 0.0.40
codegen_flags: <defaults>
</compile_context>

<pallas_src>
import jax
import jax.numpy as jnp
from jax import lax
from jax.experimental import pallas as pl
from jax.experimental.pallas import tpu as pltpu


LANE = 128  # TPU lane width: last block dim must be a multiple of this.


def _round_up(x, m):
    return ((x + m - 1) // m) * m


# ----------------------------------------------------------------------------
# Kernel
# ----------------------------------------------------------------------------
def make_discriminator_kernel(layer_num, n_true, n_tile, n_tiles_per_seg,
                              has_padding, use_bf16_matmul):
    """Conv1d(k=1)+LeakyReLU stack + lane-dense running sum/max pooling."""
    blocks_per_tile = n_tile // LANE

    def kernel(x_ref, *refs):
        # refs = [convW0, convB0, ..., convW_{L-1}, convB_{L-1},   (inputs)
        #         sum_ref, max_ref]                                (outputs)
        conv_refs = refs[: 2 * layer_num]
        sum_ref = refs[2 * layer_num + 0]       # (1, 1, C_last, LANE)
        max_ref = refs[2 * layer_num + 1]       # (1, 1, C_last, LANE)

        s = pl.program_id(0)                    # vertex segment (parallel)
        n = pl.program_id(2)                    # vertex tile within segment

        # Init per-(segment, batch) accumulators at the first vertex tile.
        # (Outputs act as VMEM-resident accumulators across the "arbitrary"
        #  innermost grid axis.)
        @pl.when(n == 0)
        def _():
            sum_ref[...] = jnp.zeros(sum_ref.shape, sum_ref.dtype)
            max_ref[...] = jnp.full(max_ref.shape, -jnp.inf, max_ref.dtype)

        feat = x_ref[0]                         # (C0, n_tile), lane-dense

        # Conv1d(kernel_size=1) + LeakyReLU(0.2) stack (hot path: MXU matmuls).
        for i in range(layer_num):
            w = conv_refs[2 * i][...]           # (Cout, Cin)
            bcol = conv_refs[2 * i + 1][...]    # (Cout, 1)
            if use_bf16_matmul:
                z = jnp.dot(w.astype(jnp.bfloat16), feat.astype(jnp.bfloat16),
                            preferred_element_type=jnp.float32)
            else:
                z = jnp.dot(w, feat, preferred_element_type=jnp.float32)
            feat = z + bcol
            feat = jnp.maximum(feat, 0.2 * feat)     # LeakyReLU(0.2)

        def accumulate(feat_for_sum, feat_for_max):
            # Lane-dense per-lane partials: fold the n_tile lanes down to 128
            # lanes with vreg-aligned 128-wide slices (pure VPU work).
            part_s = feat_for_sum[:, 0:LANE]
            part_m = feat_for_max[:, 0:LANE]
            for k in range(1, blocks_per_tile):
                part_s = part_s + feat_for_sum[:, k * LANE:(k + 1) * LANE]
                part_m = jnp.maximum(part_m,
                                     feat_for_max[:, k * LANE:(k + 1) * LANE])
            sum_ref[...] = sum_ref[...] + part_s[None, None]
            max_ref[...] = jnp.maximum(max_ref[...], part_m[None, None])

        if has_padding:
            global_tile = s * n_tiles_per_seg + n
            tile_has_pad = (global_tile + 1) * n_tile > n_true

            # Interior (fully valid) tiles: no iota/compare/select work.
            @pl.when(jnp.logical_not(tile_has_pad))
            def _():
                accumulate(feat, feat)

            # Tiles touching the padded tail: mask padded lane columns.
            @pl.when(tile_has_pad)
            def _():
                col = (global_tile * n_tile
                       + lax.broadcasted_iota(jnp.int32, (1, n_tile), 1))
                valid = col < n_true
                accumulate(jnp.where(valid, feat, 0.0),
                           jnp.where(valid, feat, -jnp.inf))
        else:
            accumulate(feat, feat)

    return kernel


# ----------------------------------------------------------------------------
# Wrapper
# ----------------------------------------------------------------------------
def discriminator_forward(f, conv_params, lin_params, *,
                          max_vertex_tile=8192, use_bf16_matmul=True):
    """f: (B, N, C0) float32.  Returns (B, 1) float32 (== PyTorch forward)."""
    B, N, C0 = f.shape
    layer_num = len(conv_params)
    c_last = conv_params[-1][0].shape[0]
    chans = [C0] + [w.shape[0] for (w, _) in conv_params]

    # --- host-side layout plumbing (one-time, outside the hot loop) ---------
    # NCW: channels on sublanes, vertices on the 128-wide lane axis.
    f_ncw = jnp.transpose(f, (0, 2, 1)).astype(jnp.float32)          # (B, C0, N)

    # Rough per-grid-step VMEM working set (bytes) for a given vertex tile.
    weight_bytes = 2 * sum(int(w.size) + int(b.size) for (w, b) in conv_params) * 4
    out_bytes = 2 * 2 * c_last * LANE * 4

    def vmem_estimate(nt):
        act = sum(chans) * nt * 4 * 2          # activations + temporaries margin
        inp = 2 * C0 * nt * 4                  # double-buffered input tile
        return act + inp + weight_bytes + out_bytes

    # Vertex tile: large (fewer grid steps, big contiguous DMAs), multiple of
    # 128 lanes, capped so the working set stays well under VMEM on every
    # generation (v7x has only 64 MiB physical).
    n_tile = min(_round_up(N, LANE), _round_up(max_vertex_tile, LANE))
    while n_tile > LANE and vmem_estimate(n_tile) > (20 << 20):
        n_tile = max(LANE, _round_up(n_tile // 2, LANE))

    n_tiles = pl.cdiv(N, n_tile)

    # v7x megacore: if the batch axis can't feed both TensorCores, split the
    # vertex axis into two "parallel" segments instead. Harmless elsewhere.
    n_seg = 2 if (B == 1 and n_tiles >= 2) else 1
    n_tiles_per_seg = pl.cdiv(n_tiles, n_seg)
    n_pad = n_seg * n_tiles_per_seg * n_tile
    if n_pad != N:
        f_ncw = jnp.pad(f_ncw, ((0, 0), (0, 0), (0, n_pad - N)))
    has_padding = (n_pad != N)

    vmem_limit_bytes = int(min(max(32 << 20, 2 * vmem_estimate(n_tile)), 48 << 20))

    # --- kernel operands -----------------------------------------------------
    flat_params = []
    in_specs = [pl.BlockSpec((1, C0, n_tile),
                             lambda s, b, n: (b, 0, s * n_tiles_per_seg + n))]

    # Conv weights stay (Cout, Cin) (kernel computes W @ feat: no in-kernel
    # transpose); biases become (Cout, 1) lane-broadcast columns.
    for (w, bias) in conv_params:
        w = w.astype(jnp.float32)
        bias_col = jnp.reshape(bias, (-1, 1)).astype(jnp.float32)
        flat_params += [w, bias_col]
        in_specs += [
            pl.BlockSpec(w.shape, lambda s, b, n: (0, 0)),
            pl.BlockSpec(bias_col.shape, lambda s, b, n: (0, 0)),
        ]

    kernel = make_discriminator_kernel(layer_num, N, n_tile, n_tiles_per_seg,
                                       has_padding, use_bf16_matmul)

    sum_part, max_part = pl.pallas_call(
        kernel,
        out_shape=(
            jax.ShapeDtypeStruct((n_seg, B, c_last, LANE), jnp.float32),
            jax.ShapeDtypeStruct((n_seg, B, c_last, LANE), jnp.float32),
        ),
        grid=(n_seg, B, n_tiles_per_seg),
        in_specs=in_specs,
        out_specs=(
            pl.BlockSpec((1, 1, c_last, LANE), lambda s, b, n: (s, b, 0, 0)),
            pl.BlockSpec((1, 1, c_last, LANE), lambda s, b, n: (s, b, 0, 0)),
        ),
        compiler_params=pltpu.CompilerParams(
            dimension_semantics=("parallel", "parallel", "arbitrary"),
            vmem_limit_bytes=vmem_limit_bytes),
    )(f_ncw, *flat_params)

    # --- tiny host-side finish (negligible FLOPs) ----------------------------
    # Combine segments + cross-lane reduce, then the 4 activation-free Linears.
    out_avg = jnp.sum(sum_part, axis=(0, 3)) / float(N)      # (B, C_last)
    out_max = jnp.max(max_part, axis=(0, 3))                 # (B, C_last)
    out = jnp.concatenate([out_avg, out_max], axis=-1)       # (B, 2*C_last)
    for w, b in lin_params:                                   # final_layer
        out = out @ w.T.astype(jnp.float32) + jnp.reshape(b, (1, -1))
    return out                                                # (B, 1)


# ----------------------------------------------------------------------------
# Pure-JAX reference (mirrors the PyTorch forward exactly, f32)
# ----------------------------------------------------------------------------
def reference_forward(f, conv_params, lin_params):
    feat = jnp.transpose(f, (0, 2, 1))                        # (B, C0, N) == NCW
    for w, b in conv_params:                                  # Conv1d k=1
        feat = jnp.einsum("oc,bcn->bon", w, feat) + b.reshape(1, -1, 1)
        feat = jnp.where(feat >= 0, feat, 0.2 * feat)         # LeakyReLU(0.2)
    out_avg = jnp.mean(feat, axis=-1)                         # avg_pool1d(k=N)
    out_max = jnp.max(feat, axis=-1)                          # max_pool1d(k=N)
    out = jnp.concatenate([out_avg, out_max], axis=-1)
    for w, b in lin_params:                                   # final_layer
        out = out @ w.T + b.reshape(1, -1)
    return out


# ----------------------------------------------------------------------------
# Main
# ----------------------------------------------------------------------------
if __name__ == "__main__":
    # cfg.features (small, consistent with the module's construction)
    features = [4, 16, 32]          # layer_num = 2
    layer_num = len(features) - 1
    key = jax.random.PRNGKey(0)

    def draw(k, shape, scale=0.1):
        return scale * jax.random.normal(k, shape, dtype=jnp.float32)

    keys = jax.random.split(key, 2 * layer_num + 8 + 2)
    ki = iter(range(len(keys)))

    conv_params = []
    for i in range(layer_num):
        w = draw(keys[next(ki)], (features[i + 1], features[i]))   # (Cout, Cin)
        b = draw(keys[next(ki)], (features[i + 1],))               # (Cout,)
        conv_params.append((w, b))

    lin_dims = [
        (2 * features[-1], features[-1]),
        (features[-1], features[-2]),
        (features[-2], features[-2]),
        (features[-2], 1),
    ]
    lin_params = []
    for (din, dout) in lin_dims:
        w = draw(keys[next(ki)], (dout, din))                      # (Dout, Din)
        b = draw(keys[next(ki)], (dout,))                          # (Dout,)
        lin_params.append((w, b))

    # Test 1: tiny shapes (B=2, vertex_num=8, C0=4), single tile, masked pad.
    B, N = 2, 8
    f1 = jax.random.normal(keys[next(ki)], (B, N, features[0]), dtype=jnp.float32)
    out1 = jax.block_until_ready(discriminator_forward(f1, conv_params, lin_params))
    ref1 = reference_forward(f1, conv_params, lin_params)
    assert out1.shape == (B, 1), out1.shape
    assert jnp.allclose(out1, ref1, atol=5e-3, rtol=5e-3), (out1, ref1)

    # Test 2: B=1, N=260 with a small forced tile -> exercises the two-segment
    # "parallel" vertex split, multiple tiles, a partially padded tile and a
    # fully padded tile.
    B2, N2 = 1, 260
    f2 = jax.random.normal(keys[next(ki)], (B2, N2, features[0]), dtype=jnp.float32)
    out2 = jax.block_until_ready(
        discriminator_forward(f2, conv_params, lin_params, max_vertex_tile=128))
    ref2 = reference_forward(f2, conv_params, lin_params)
    assert out2.shape == (B2, 1), out2.shape
    assert jnp.allclose(out2, ref2, atol=5e-3, rtol=5e-3), (out2, ref2)

    print("KERNEL_OK")
</pallas_src>

<mosaic_0001>
module attributes {stable_mosaic.version = 11 : i64} {
  func.func @kernel(%arg0: i32, %arg1: i32, %arg2: i32, %arg3: memref<1x4x128xf32, #tpu.memory_space<vmem>>, %arg4: memref<16x4xf32, #tpu.memory_space<vmem>>, %arg5: memref<16x1xf32, #tpu.memory_space<vmem>>, %arg6: memref<32x16xf32, #tpu.memory_space<vmem>>, %arg7: memref<32x1xf32, #tpu.memory_space<vmem>>, %arg8: memref<1x1x32x128xf32, #tpu.memory_space<vmem>>, %arg9: memref<1x1x32x128xf32, #tpu.memory_space<vmem>>) attributes {dimension_semantics = [#tpu.dimension_semantics<parallel>, #tpu.dimension_semantics<parallel>, #tpu.dimension_semantics<arbitrary>], iteration_bounds = array<i64: 1, 2, 1>, scalar_prefetch = 0 : i64, scratch_operands = 0 : i64, tpu.core_type = #tpu.core_type<tc>, window_params = [{transform_indices = @transform_0, window_bounds = array<i64: 1, 4, 128>}, {pipeline_mode = #tpu.pipeline_mode<synchronous>, transform_indices = @transform_1, window_bounds = array<i64: 16, 4>}, {pipeline_mode = #tpu.pipeline_mode<synchronous>, transform_indices = @transform_2, window_bounds = array<i64: 16, 1>}, {pipeline_mode = #tpu.pipeline_mode<synchronous>, transform_indices = @transform_3, window_bounds = array<i64: 32, 16>}, {pipeline_mode = #tpu.pipeline_mode<synchronous>, transform_indices = @transform_4, window_bounds = array<i64: 32, 1>}, {transform_indices = @transform_5, window_bounds = array<i64: 1, 1, 32, 128>}, {transform_indices = @transform_6, window_bounds = array<i64: 1, 1, 32, 128>}]} {
    %c0_i32 = arith.constant 0 : i32
    %0 = arith.cmpi eq, %arg2, %c0_i32 : i32
    %1 = arith.extui %0 : i1 to i32
    %c0_i32_0 = arith.constant 0 : i32
    %2 = arith.cmpi ne, %1, %c0_i32_0 : i32
    scf.if %2 {
      %cst_17 = arith.constant 0.000000e+00 : f32
      %35 = vector.broadcast %cst_17 : f32 to vector<1x1x32x128xf32>
      %c0_18 = arith.constant 0 : index
      %c0_19 = arith.constant 0 : index
      %c0_20 = arith.constant 0 : index
      %c0_21 = arith.constant 0 : index
      %36 = vector.load %arg8[%c0_18, %c0_19, %c0_20, %c0_21] : memref<1x1x32x128xf32, #tpu.memory_space<vmem>>, vector<1x1x32x128xf32>
      tpu.vector_store %arg8[%c0_18, %c0_19, %c0_20, %c0_21], %35 {strides = array<i32>} : memref<1x1x32x128xf32, #tpu.memory_space<vmem>>, vector<1x1x32x128xf32>,
      %cst_22 = arith.constant 0xFF800000 : f32
      %37 = vector.broadcast %cst_22 : f32 to vector<1x1x32x128xf32>
      %c0_23 = arith.constant 0 : index
      %c0_24 = arith.constant 0 : index
      %c0_25 = arith.constant 0 : index
      %c0_26 = arith.constant 0 : index
      %38 = vector.load %arg9[%c0_23, %c0_24, %c0_25, %c0_26] : memref<1x1x32x128xf32, #tpu.memory_space<vmem>>, vector<1x1x32x128xf32>
      tpu.vector_store %arg9[%c0_23, %c0_24, %c0_25, %c0_26], %37 {strides = array<i32>} : memref<1x1x32x128xf32, #tpu.memory_space<vmem>>, vector<1x1x32x128xf32>,
    } else {
    }
    %c0 = arith.constant 0 : index
    %c0_1 = arith.constant 0 : index
    %c0_2 = arith.constant 0 : index
    %3 = vector.load %arg3[%c0, %c0_1, %c0_2] : memref<1x4x128xf32, #tpu.memory_space<vmem>>, vector<1x4x128xf32>
    %4 = vector.shape_cast %3 : vector<1x4x128xf32> to vector<4x128xf32>
    %c0_3 = arith.constant 0 : index
    %c0_4 = arith.constant 0 : index
    %5 = vector.load %arg4[%c0_3, %c0_4] : memref<16x4xf32, #tpu.memory_space<vmem>>, vector<16x4xf32>
    %c0_5 = arith.constant 0 : index
    %c0_6 = arith.constant 0 : index
    %6 = vector.load %arg5[%c0_5, %c0_6] : memref<16x1xf32, #tpu.memory_space<vmem>>, vector<16x1xf32>
    %7 = arith.truncf %5 : vector<16x4xf32> to vector<16x4xbf16>
    %8 = arith.truncf %4 : vector<4x128xf32> to vector<4x128xbf16>
    %cst = arith.constant dense<0.000000e+00> : vector<16x128xf32>
    %9 = tpu.matmul %7, %8, %cst {dimension_numbers = #tpu.dot_dimension_numbers<[1], [0], [0], [1], [0, 0, 1, 1], [], []>} : vector<16x4xbf16>, vector<4x128xbf16>, vector<16x128xf32> -> vector<16x128xf32>
    %10 = vector.broadcast %6 : vector<16x1xf32> to vector<16x128xf32>
    %11 = arith.addf %9, %10 : vector<16x128xf32>
    %cst_7 = arith.constant 2.000000e-01 : f32
    %12 = vector.broadcast %cst_7 : f32 to vector<16x128xf32>
    %13 = arith.mulf %12, %11 : vector<16x128xf32>
    %14 = arith.maximumf %11, %13 : vector<16x128xf32>
    %c0_8 = arith.constant 0 : index
    %c0_9 = arith.constant 0 : index
    %15 = vector.load %arg6[%c0_8, %c0_9] : memref<32x16xf32, #tpu.memory_space<vmem>>, vector<32x16xf32>
    %c0_10 = arith.constant 0 : index
    %c0_11 = arith.constant 0 : index
    %16 = vector.load %arg7[%c0_10, %c0_11] : memref<32x1xf32, #tpu.memory_space<vmem>>, vector<32x1xf32>
    %17 = arith.truncf %15 : vector<32x16xf32> to vector<32x16xbf16>
    %18 = arith.truncf %14 : vector<16x128xf32> to vector<16x128xbf16>
    %cst_12 = arith.constant dense<0.000000e+00> : vector<32x128xf32>
    %19 = tpu.matmul %17, %18, %cst_12 {dimension_numbers = #tpu.dot_dimension_numbers<[1], [0], [0], [1], [0, 0, 1, 1], [], []>} : vector<32x16xbf16>, vector<16x128xbf16>, vector<32x128xf32> -> vector<32x128xf32>
    %20 = vector.broadcast %16 : vector<32x1xf32> to vector<32x128xf32>
    %21 = arith.addf %19, %20 : vector<32x128xf32>
    %cst_13 = arith.constant 2.000000e-01 : f32
    %22 = vector.broadcast %cst_13 : f32 to vector<32x128xf32>
    %23 = arith.mulf %22, %21 : vector<32x128xf32>
    %24 = arith.maximumf %21, %23 : vector<32x128xf32>
    %c1_i32 = arith.constant 1 : i32
    %25 = arith.muli %arg0, %c1_i32 : i32
    %26 = arith.addi %25, %arg2 : i32
    %c1_i32_14 = arith.constant 1 : i32
    %27 = arith.addi %26, %c1_i32_14 : i32
    %c128_i32 = arith.constant 128 : i32
    %28 = arith.muli %27, %c128_i32 : i32
    %c8_i32 = arith.constant 8 : i32
    %29 = arith.cmpi sgt, %28, %c8_i32 : i32
    %true = arith.constant true
    %30 = arith.xori %29, %true : i1
    %31 = arith.extui %30 : i1 to i32
    %c0_i32_15 = arith.constant 0 : i32
    %32 = arith.cmpi ne, %31, %c0_i32_15 : i32
    scf.if %32 {
      %c0_17 = arith.constant 0 : index
      %c0_18 = arith.constant 0 : index
      %c0_19 = arith.constant 0 : index
      %c0_20 = arith.constant 0 : index
      %35 = vector.load %arg8[%c0_17, %c0_18, %c0_19, %c0_20] : memref<1x1x32x128xf32, #tpu.memory_space<vmem>>, vector<1x1x32x128xf32>
      %36 = vector.shape_cast %24 : vector<32x128xf32> to vector<1x1x32x128xf32>
      %37 = arith.addf %35, %36 : vector<1x1x32x128xf32>
      %c0_21 = arith.constant 0 : index
      %c0_22 = arith.constant 0 : index
      %c0_23 = arith.constant 0 : index
      %c0_24 = arith.constant 0 : index
      %38 = vector.load %arg8[%c0_21, %c0_22, %c0_23, %c0_24] : memref<1x1x32x128xf32, #tpu.memory_space<vmem>>, vector<1x1x32x128xf32>
      tpu.vector_store %arg8[%c0_21, %c0_22, %c0_23, %c0_24], %37 {strides = array<i32>} : memref<1x1x32x128xf32, #tpu.memory_space<vmem>>, vector<1x1x32x128xf32>,
      %c0_25 = arith.constant 0 : index
      %c0_26 = arith.constant 0 : index
      %c0_27 = arith.constant 0 : index
      %c0_28 = arith.constant 0 : index
      %39 = vector.load %arg9[%c0_25, %c0_26, %c0_27, %c0_28] : memref<1x1x32x128xf32, #tpu.memory_space<vmem>>, vector<1x1x32x128xf32>
      %40 = vector.shape_cast %24 : vector<32x128xf32> to vector<1x1x32x128xf32>
      %41 = arith.maximumf %39, %40 : vector<1x1x32x128xf32>
      %c0_29 = arith.constant 0 : index
      %c0_30 = arith.constant 0 : index
      %c0_31 = arith.constant 0 : index
      %c0_32 = arith.constant 0 : index
      %42 = vector.load %arg9[%c0_29, %c0_30, %c0_31, %c0_32] : memref<1x1x32x128xf32, #tpu.memory_space<vmem>>, vector<1x1x32x128xf32>
      tpu.vector_store %arg9[%c0_29, %c0_30, %c0_31, %c0_32], %41 {strides = array<i32>} : memref<1x1x32x128xf32, #tpu.memory_space<vmem>>, vector<1x1x32x128xf32>,
    } else {
    }
    %33 = arith.extui %29 : i1 to i32
    %c0_i32_16 = arith.constant 0 : i32
    %34 = arith.cmpi ne, %33, %c0_i32_16 : i32
    scf.if %34 {
      %c128_i32_17 = arith.constant 128 : i32
      %35 = arith.muli %26, %c128_i32_17 : i32
      %36 = tpu.iota {dimensions = array<i32: 1>} : vector<1x128xi32>
      %37 = vector.broadcast %35 : i32 to vector<1x128xi32>
      %38 = arith.addi %37, %36 : vector<1x128xi32>
      %c8_i32_18 = arith.constant 8 : i32
      %39 = vector.broadcast %c8_i32_18 : i32 to vector<1x128xi32>
      %40 = arith.cmpi slt, %38, %39 : vector<1x128xi32>
      %cst_19 = arith.constant 0.000000e+00 : f32
      %41 = vector.shape_cast %40 : vector<1x128xi1> to vector<1x128xi1>
      %42 = vector.broadcast %41 : vector<1x128xi1> to vector<32x128xi1>
      %43 = vector.broadcast %cst_19 : f32 to vector<32x128xf32>
      %44 = arith.select %42, %24, %43 : vector<32x128xi1>, vector<32x128xf32>
      %cst_20 = arith.constant 0xFF800000 : f32
      %45 = vector.shape_cast %40 : vector<1x128xi1> to vector<1x128xi1>
      %46 = vector.broadcast %45 : vector<1x128xi1> to vector<32x128xi1>
      %47 = vector.broadcast %cst_20 : f32 to vector<32x128xf32>
      %48 = arith.select %46, %24, %47 : vector<32x128xi1>, vector<32x128xf32>
      %c0_21 = arith.constant 0 : index
      %c0_22 = arith.constant 0 : index
      %c0_23 = arith.constant 0 : index
      %c0_24 = arith.constant 0 : index
      %49 = vector.load %arg8[%c0_21, %c0_22, %c0_23, %c0_24] : memref<1x1x32x128xf32, #tpu.memory_space<vmem>>, vector<1x1x32x128xf32>
      %50 = vector.shape_cast %44 : vector<32x128xf32> to vector<1x1x32x128xf32>
      %51 = arith.addf %49, %50 : vector<1x1x32x128xf32>
      %c0_25 = arith.constant 0 : index
      %c0_26 = arith.constant 0 : index
      %c0_27 = arith.constant 0 : index
      %c0_28 = arith.constant 0 : index
      %52 = vector.load %arg8[%c0_25, %c0_26, %c0_27, %c0_28] : memref<1x1x32x128xf32, #tpu.memory_space<vmem>>, vector<1x1x32x128xf32>
      tpu.vector_store %arg8[%c0_25, %c0_26, %c0_27, %c0_28], %51 {strides = array<i32>} : memref<1x1x32x128xf32, #tpu.memory_space<vmem>>, vector<1x1x32x128xf32>,
      %c0_29 = arith.constant 0 : index
      %c0_30 = arith.constant 0 : index
      %c0_31 = arith.constant 0 : index
      %c0_32 = arith.constant 0 : index
      %53 = vector.load %arg9[%c0_29, %c0_30, %c0_31, %c0_32] : memref<1x1x32x128xf32, #tpu.memory_space<vmem>>, vector<1x1x32x128xf32>
      %54 = vector.shape_cast %48 : vector<32x128xf32> to vector<1x1x32x128xf32>
      %55 = arith.maximumf %53, %54 : vector<1x1x32x128xf32>
      %c0_33 = arith.constant 0 : index
      %c0_34 = arith.constant 0 : index
      %c0_35 = arith.constant 0 : index
      %c0_36 = arith.constant 0 : index
      %56 = vector.load %arg9[%c0_33, %c0_34, %c0_35, %c0_36] : memref<1x1x32x128xf32, #tpu.memory_space<vmem>>, vector<1x1x32x128xf32>
      tpu.vector_store %arg9[%c0_33, %c0_34, %c0_35, %c0_36], %55 {strides = array<i32>} : memref<1x1x32x128xf32, #tpu.memory_space<vmem>>, vector<1x1x32x128xf32>,
    } else {
    }
    return
  }
  func.func @transform_0(%arg0: i32, %arg1: i32, %arg2: i32) -> (i32, i32, i32) {
    %c1_i32 = arith.constant 1 : i32
    %0 = arith.muli %arg0, %c1_i32 : i32
    %1 = arith.addi %0, %arg2 : i32
    %c0_i32 = arith.constant 0 : i32
    %c0_i32_0 = arith.constant 0 : i32
    return %arg1, %c0_i32, %1 : i32, i32, i32
  }
  func.func @transform_1(%arg0: i32, %arg1: i32, %arg2: i32) -> (i32, i32) {
    %c0_i32 = arith.constant 0 : i32
    %c0_i32_0 = arith.constant 0 : i32
    %c0_i32_1 = arith.constant 0 : i32
    return %c0_i32, %c0_i32_0 : i32, i32
  }
  func.func @transform_2(%arg0: i32, %arg1: i32, %arg2: i32) -> (i32, i32) {
    %c0_i32 = arith.constant 0 : i32
    %c0_i32_0 = arith.constant 0 : i32
    %c0_i32_1 = arith.constant 0 : i32
    return %c0_i32, %c0_i32_0 : i32, i32
  }
  func.func @transform_3(%arg0: i32, %arg1: i32, %arg2: i32) -> (i32, i32) {
    %c0_i32 = arith.constant 0 : i32
    %c0_i32_0 = arith.constant 0 : i32
    %c0_i32_1 = arith.constant 0 : i32
    return %c0_i32, %c0_i32_0 : i32, i32
  }
  func.func @transform_4(%arg0: i32, %arg1: i32, %arg2: i32) -> (i32, i32) {
    %c0_i32 = arith.constant 0 : i32
    %c0_i32_0 = arith.constant 0 : i32
    %c0_i32_1 = arith.constant 0 : i32
    return %c0_i32, %c0_i32_0 : i32, i32
  }
  func.func @transform_5(%arg0: i32, %arg1: i32, %arg2: i32) -> (i32, i32, i32, i32) {
    %c0_i32 = arith.constant 0 : i32
    %c0_i32_0 = arith.constant 0 : i32
    %c0_i32_1 = arith.constant 0 : i32
    return %arg0, %arg1, %c0_i32, %c0_i32_0 : i32, i32, i32, i32
  }
  func.func @transform_6(%arg0: i32, %arg1: i32, %arg2: i32) -> (i32, i32, i32, i32) {
    %c0_i32 = arith.constant 0 : i32
    %c0_i32_0 = arith.constant 0 : i32
    %c0_i32_1 = arith.constant 0 : i32
    return %arg0, %arg1, %c0_i32, %c0_i32_0 : i32, i32, i32, i32
  }
}

</mosaic_0001>

<llo_original>
// kernel: tpu_custom_call.1
$region0: #{tpu_custom_call.1}
  #allocation0 [shape = 'u32[]', space=smem, size = 0x4, offset = 0x4, fixed_abs, tag = 'smem constant byte address 0x4 - core index']
  #allocation1 [shape = 'u32[72,128]{1,0:T(1,128)}', space=vmem, size = 0x9000, scoped, tag = 'internal scratch']
  %s0 = inlined_call_operand.vmem [shape: f32[2,4,128], index: 0, kind: input, shape index: {}]
  %s1 = inlined_call_operand.vmem [shape: f32[16,4], index: 1, kind: input, shape index: {}]
  %s2 = inlined_call_operand.vmem [shape: f32[16,1], index: 2, kind: input, shape index: {}]
  %s3 = inlined_call_operand.vmem [shape: f32[32,16], index: 3, kind: input, shape index: {}]
  %s4 = inlined_call_operand.vmem [shape: f32[32,1], index: 4, kind: input, shape index: {}]
  %s5 = inlined_call_operand.hbm [shape: f32[1,2,32,128], index: 5, kind: output, shape index: {0}]
  %s6 = inlined_call_operand.hbm [shape: f32[1,2,32,128], index: 6, kind: output, shape index: {1}]
  %7 = xla_tuple %s5, %s6
  %s8 = sld [smem:[#allocation0]]
  $region73: #{tpu_custom_call.1} parent=0
    _
  %s10 = ssub.s32 1, %s8
  %s11 = scalar_select 0, %s10, %s8
  $region1: #{tpu_custom_call.1} parent=0
    #allocation2 [shape = 'u8[32768]{0}', space=vmem, size = 0x8000, scoped, tag = 'output window, operand 0']
    #allocation3 [shape = 's32[2]{0}', space=sflag, size = 0x8, scoped, tag = 'scoped memory for tpu_custom_call.1']
    #allocation4 [shape = 'u8[32768]{0}', space=vmem, size = 0x8000, scoped, tag = 'output window, operand 1']
    #allocation5 [shape = 's32[2]{0}', space=sflag, size = 0x8, scoped, tag = 'scoped memory for tpu_custom_call.1']
    %12 = vsyncpa [#allocation3], 0
    %s13 = scalar_lea.sflag [#allocation3], 1
    %14 = vsyncpa %s13, 0
    %15 = vsyncpa [#allocation5], 0
    %s16 = scalar_lea.sflag [#allocation5], 1
    %17 = vsyncpa %s16, 0
    loop: start=0, step=1, limit=4
    $region2: #{tpu_custom_call.1} parent=1 // loop_pre_header
      _
    $region3: #{tpu_custom_call.1} parent=1 // loop_header
      %s19 = sphi 0, %s23
      %p20 = scmp.ge.s32.totalorder %s19, 4
      %s26 = sphi 0, %s45
      %s27 = sphi 0, %s41
      %s28 = sphi 0, %s37
      %s29 = sphi 0, %s26
      %s30 = sphi 0, %s27
      %s31 = sphi 0, %s28
      %s32 = sphi 0, %s29
      %s33 = sphi 0, %s30
      %s34 = sphi 0, %s31
      %s52 = sphi 0, %s54
      %s55 = sphi 0, %s52
      %s56 = sphi 0, %s55
      %s72 = sphi 0, %s56
      %s76 = sphi 0, %s76
      %s78 = sphi 0, %s76
      %s79 = sphi 0, %s78
      %s93 = sphi 0, %s79
      %s97 = sphi 0, %s97
      %s99 = sphi 0, %s97
      %s100 = sphi 0, %s99
      %s114 = sphi 0, %s100
      %s118 = sphi 0, %s118
      %s120 = sphi 0, %s118
      %s121 = sphi 0, %s120
      %s135 = sphi 0, %s121
      %s139 = sphi 0, %s139
      %s141 = sphi 0, %s139
      %s142 = sphi 0, %s141
      %s156 = sphi 0, %s142
      %s164 = sphi 0, %s166
      %s167 = sphi 0, %s164
      %s168 = sphi 0, %s167
      %s184 = sphi 0, %s168
      %s192 = sphi 0, %s194
      %s195 = sphi 0, %s192
      %s196 = sphi 0, %s195
      %s212 = sphi 0, %s196
    $region4: #{tpu_custom_call.1} parent=1 // loop_header_branch
      %22 = sbr.rel (%p20) target = $region8
    $region5: #{tpu_custom_call.1} parent=1 // loop_body
      %s24 = ssub.s32 %s19, 1
      %s25 = ssub.s32 %s19, 2
      %s35 = sadd.s32 1, %s28
      %p36 = scmp.ge.s32.totalorder %s35, 1
      %s37 = scalar_select %p36, 0, %s35
      %s38 = sadd.s32 1, %s27
      %s39 = scalar_select %p36, %s38, %s27
      %p40 = scmp.ge.s32.totalorder %s39, 2
      %s41 = scalar_select %p40, 0, %s39
      %s42 = sadd.s32 1, %s26
      %s43 = scalar_select %p40, %s42, %s26
      %p44 = scmp.ge.s32.totalorder %s43, 1
      %s45 = scalar_select %p44, 0, %s43
      %s46 = sadd.s32 %s26, %s28
      %s47 = sadd.s32 %s45, %s37
      %s48 = ssub.s32 %s27, %s41
      %s49 = ssub.s32 %s46, %s47
      %s50 = sor.u32 %s48, %s49
      %p51 = scmp.eq.s32.totalorder %s50, 0
      %s53 = sadd.s32 %s52, 1
      %s54 = scalar_select %p51, %s52, %s53
      %p57 = pneg %p51
      %p58 = scmp.eq.s32.totalorder %s19, 1
      %p59 = por %p57, %p58
      %p60 = scmp.ne.s32.totalorder %s52, %s55
      %p61 = scmp.eq.s32.totalorder %s19, 0
      %p62 = por %p60, %p61
      %p63 = scmp.ne.s32.totalorder %s52, %s55
      %p64 = scmp.eq.s32.totalorder %s24, 1
      %p65 = por %p63, %p64
      %p66 = scmp.ne.s32.totalorder %s55, %s56
      %p67 = scmp.eq.s32.totalorder %s24, 0
      %p68 = por %p66, %p67
      %p69 = scmp.ne.s32.totalorder %s55, %s56
      %p70 = scmp.eq.s32.totalorder %s25, 1
      %p71 = por %p69, %p70
      %p73 = scmp.ne.s32.totalorder %s56, %s72
      %p74 = scmp.eq.s32.totalorder %s25, 0
      %p75 = por %p73, %p74
      %s77 = sadd.s32 %s76, 1
      %p80 = scmp.eq.s32.totalorder %s19, 1
      %p81 = scmp.ne.s32.totalorder %s76, %s78
      %p82 = scmp.eq.s32.totalorder %s19, 0
      %p83 = por %p81, %p82
      %p84 = scmp.ne.s32.totalorder %s76, %s78
      %p85 = scmp.eq.s32.totalorder %s24, 1
      %p86 = por %p84, %p85
      %p87 = scmp.ne.s32.totalorder %s78, %s79
      %p88 = scmp.eq.s32.totalorder %s24, 0
      %p89 = por %p87, %p88
      %p90 = scmp.ne.s32.totalorder %s78, %s79
      %p91 = scmp.eq.s32.totalorder %s25, 1
      %p92 = por %p90, %p91
      %p94 = scmp.ne.s32.totalorder %s79, %s93
      %p95 = scmp.eq.s32.totalorder %s25, 0
      %p96 = por %p94, %p95
      %s98 = sadd.s32 %s97, 1
      %p101 = scmp.eq.s32.totalorder %s19, 1
      %p102 = scmp.ne.s32.totalorder %s97, %s99
      %p103 = scmp.eq.s32.totalorder %s19, 0
      %p104 = por %p102, %p103
      %p105 = scmp.ne.s32.totalorder %s97, %s99
      %p106 = scmp.eq.s32.totalorder %s24, 1
      %p107 = por %p105, %p106
      %p108 = scmp.ne.s32.totalorder %s99, %s100
      %p109 = scmp.eq.s32.totalorder %s24, 0
      %p110 = por %p108, %p109
      %p111 = scmp.ne.s32.totalorder %s99, %s100
      %p112 = scmp.eq.s32.totalorder %s25, 1
      %p113 = por %p111, %p112
      %p115 = scmp.ne.s32.totalorder %s100, %s114
      %p116 = scmp.eq.s32.totalorder %s25, 0
      %p117 = por %p115, %p116
      %s119 = sadd.s32 %s118, 1
      %p122 = scmp.eq.s32.totalorder %s19, 1
      %p123 = scmp.ne.s32.totalorder %s118, %s120
      %p124 = scmp.eq.s32.totalorder %s19, 0
      %p125 = por %p123, %p124
      %p126 = scmp.ne.s32.totalorder %s118, %s120
      %p127 = scmp.eq.s32.totalorder %s24, 1
      %p128 = por %p126, %p127
      %p129 = scmp.ne.s32.totalorder %s120, %s121
      %p130 = scmp.eq.s32.totalorder %s24, 0
      %p131 = por %p129, %p130
      %p132 = scmp.ne.s32.totalorder %s120, %s121
      %p133 = scmp.eq.s32.totalorder %s25, 1
      %p134 = por %p132, %p133
      %p136 = scmp.ne.s32.totalorder %s121, %s135
      %p137 = scmp.eq.s32.totalorder %s25, 0
      %p138 = por %p136, %p137
      %s140 = sadd.s32 %s139, 1
      %p143 = scmp.eq.s32.totalorder %s19, 1
      %p144 = scmp.ne.s32.totalorder %s139, %s141
      %p145 = scmp.eq.s32.totalorder %s19, 0
      %p146 = por %p144, %p145
      %p147 = scmp.ne.s32.totalorder %s139, %s141
      %p148 = scmp.eq.s32.totalorder %s24, 1
      %p149 = por %p147, %p148
      %p150 = scmp.ne.s32.totalorder %s141, %s142
      %p151 = scmp.eq.s32.totalorder %s24, 0
      %p152 = por %p150, %p151
      %p153 = scmp.ne.s32.totalorder %s141, %s142
      %p154 = scmp.eq.s32.totalorder %s25, 1
      %p155 = por %p153, %p154
      %p157 = scmp.ne.s32.totalorder %s142, %s156
      %p158 = scmp.eq.s32.totalorder %s25, 0
      %p159 = por %p157, %p158
      %s160 = ssub.s32 %s26, %s45
      %s161 = ssub.s32 %s27, %s41
      %s162 = sor.u32 %s160, %s161
      %p163 = scmp.eq.s32.totalorder %s162, 0
      %s165 = sadd.s32 %s164, 1
      %s166 = scalar_select %p163, %s164, %s165
      %p169 = pneg %p163
      %p170 = scmp.eq.s32.totalorder %s19, 1
      %p171 = por %p169, %p170
      %p172 = scmp.ne.s32.totalorder %s164, %s167
      %p173 = scmp.eq.s32.totalorder %s19, 0
      %p174 = por %p172, %p173
      %p175 = scmp.ne.s32.totalorder %s164, %s167
      %p176 = scmp.eq.s32.totalorder %s24, 1
      %p177 = por %p175, %p176
      %p178 = scmp.ne.s32.totalorder %s167, %s168
      %p179 = scmp.eq.s32.totalorder %s24, 0
      %p180 = por %p178, %p179
      %p181 = scmp.ne.s32.totalorder %s167, %s168
      %p182 = scmp.eq.s32.totalorder %s25, 1
      %p183 = por %p181, %p182
      %p185 = scmp.ne.s32.totalorder %s168, %s184
      %p186 = scmp.eq.s32.totalorder %s25, 0
      %p187 = por %p185, %p186
      %s188 = ssub.s32 %s26, %s45
      %s189 = ssub.s32 %s27, %s41
      %s190 = sor.u32 %s188, %s189
      %p191 = scmp.eq.s32.totalorder %s190, 0
      %s193 = sadd.s32 %s192, 1
      %s194 = scalar_select %p191, %s192, %s193
      %p197 = pneg %p191
      %p198 = scmp.eq.s32.totalorder %s19, 1
      %p199 = por %p197, %p198
      %p200 = scmp.ne.s32.totalorder %s192, %s195
      %p201 = scmp.eq.s32.totalorder %s19, 0
      %p202 = por %p200, %p201
      %p203 = scmp.ne.s32.totalorder %s192, %s195
      %p204 = scmp.eq.s32.totalorder %s24, 1
      %p205 = por %p203, %p204
      %p206 = scmp.ne.s32.totalorder %s195, %s196
      %p207 = scmp.eq.s32.totalorder %s24, 0
      %p208 = por %p206, %p207
      %p209 = scmp.ne.s32.totalorder %s195, %s196
      %p210 = scmp.eq.s32.totalorder %s25, 1
      %p211 = por %p209, %p210
      %p213 = scmp.ne.s32.totalorder %s196, %s212
      %p214 = scmp.eq.s32.totalorder %s25, 0
      %p215 = por %p213, %p214
      %p216 = scmp.le.s32.totalorder 1, %s19
      %p217 = scmp.lt.s32.totalorder %s19, 3
      %p218 = pnand %p216, %p217
      %p219 = pneg %p218
      // Predicated region
      $region9: #{tpu_custom_call.1} parent=5 // pred_check
        _
      $region10: #{tpu_custom_call.1} parent=5 // pred_check_branch
        %221 = sbr.rel (%p218) target = $region12
      $region11: #{tpu_custom_call.1} parent=5 // pred_region
        %s222 = ssub.s32 %s19, 1
        // Predicated region
        $region13: #{tpu_custom_call.1} parent=11 // pred_check
          %p223 = pneg %p89
        $region14: #{tpu_custom_call.1} parent=11 // pred_check_branch
          %225 = sbr.rel (%p223) target = $region16
        $region15: #{tpu_custom_call.1} parent=11 // pred_region
          _
        $region16: #{tpu_custom_call.1} parent=11 // pred_fallthru
          _
        // Predicated region
        $region17: #{tpu_custom_call.1} parent=11 // pred_check
          %p226 = pneg %p110
        $region18: #{tpu_custom_call.1} parent=11 // pred_check_branch
          %228 = sbr.rel (%p226) target = $region20
        $region19: #{tpu_custom_call.1} parent=11 // pred_region
          _
        $region20: #{tpu_custom_call.1} parent=11 // pred_fallthru
          _
        // Predicated region
        $region21: #{tpu_custom_call.1} parent=11 // pred_check
          %p229 = pneg %p131
        $region22: #{tpu_custom_call.1} parent=11 // pred_check_branch
          %231 = sbr.rel (%p229) target = $region24
        $region23: #{tpu_custom_call.1} parent=11 // pred_region
          _
        $region24: #{tpu_custom_call.1} parent=11 // pred_fallthru
          _
        // Predicated region
        $region25: #{tpu_custom_call.1} parent=11 // pred_check
          %p232 = pneg %p152
        $region26: #{tpu_custom_call.1} parent=11 // pred_check_branch
          %234 = sbr.rel (%p232) target = $region28
        $region27: #{tpu_custom_call.1} parent=11 // pred_region
          _
        $region28: #{tpu_custom_call.1} parent=11 // pred_fallthru
          _
      $region12: #{tpu_custom_call.1} parent=5 // pred_fallthru
        _
      %p235 = scmp.lt.s32.totalorder %s19, 2
      // Predicated region
      $region29: #{tpu_custom_call.1} parent=5 // pred_check
        %p236 = pneg %p235
      $region30: #{tpu_custom_call.1} parent=5 // pred_check_branch
        %238 = sbr.rel (%p236) target = $region32
      $region31: #{tpu_custom_call.1} parent=5 // pred_region
        // Predicated region
        $region33: #{tpu_custom_call.1} parent=31 // pred_check
          %p239 = pneg %p62
        $region34: #{tpu_custom_call.1} parent=31 // pred_check_branch
          %241 = sbr.rel (%p239) target = $region36
        $region35: #{tpu_custom_call.1} parent=31 // pred_region
          %s242 = sadd.s32 %s26, %s28
          %p243 = scmp.lt.s32.totalorder %s27, 1
          %s244 = scalar_select %p243, %s27, 1
          %p245 = scmp.lt.s32.totalorder %s242, 0
          %s246 = scalar_select %p245, %s242, 0
          %s247 = sadd.s32 %s246, %s244
          %s248 = smul.addr %s247, 4
          %s249 = scalar_lea.vmem %s0, %s248
          %s250 = sadd.s32 %s26, %s28
        $region36: #{tpu_custom_call.1} parent=31 // pred_fallthru
          _
      $region32: #{tpu_custom_call.1} parent=5 // pred_fallthru
        _
      %p251 = scmp.le.s32.totalorder 1, %s19
      %p252 = scmp.lt.s32.totalorder %s19, 3
      %p253 = pnand %p251, %p252
      %p254 = pneg %p253
      // Predicated region
      $region37: #{tpu_custom_call.1} parent=5 // pred_check
        _
      $region38: #{tpu_custom_call.1} parent=5 // pred_check_branch
        %256 = sbr.rel (%p253) target = $region40
      $region39: #{tpu_custom_call.1} parent=5 // pred_region
        %s257 = ssub.s32 %s19, 1
        %s258 = sadd.s32 %s29, %s31
        %p259 = scmp.lt.s32.totalorder %s30, 1
        %s260 = scalar_select %p259, %s30, 1
        %p261 = scmp.lt.s32.totalorder %s258, 0
        %s262 = scalar_select %p261, %s258, 0
        %s263 = sadd.s32 %s262, %s260
        %s264 = smul.addr %s263, 4
        %s265 = scalar_lea.vmem %s0, %s264
        %p266 = pneg %p68
        %p267 = pneg %p65
        %p268 = pneg %p89
        %p269 = pneg %p86
        %p270 = pneg %p110
        %p271 = pneg %p107
        %p272 = pneg %p131
        %p273 = pneg %p128
        %p274 = pneg %p152
        %p275 = pneg %p149
        %p276 = pneg %p180
        %p277 = pneg %p177
        %s278 = sand.u32 %s167, 1
        %s279 = scalar_lea.sflag [#allocation3], %s278
        %s280 = sand.u32 %s167, 1
        %s281 = smul.addr %s280, 32
        %s282 = scalar_lea.vmem [#allocation2], %s281
        %p283 = pneg %p208
        %p284 = pneg %p205
        %s285 = sand.u32 %s195, 1
        %s286 = scalar_lea.sflag [#allocation5], %s285
        %s287 = sand.u32 %s195, 1
        %s288 = smul.addr %s287, 32
        %s289 = scalar_lea.vmem [#allocation4], %s288
        %s290 = sadd.s32 %s29, %s31
        %p291 = scmp.lt.s32.totalorder %s30, 1
        %s292 = scalar_select %p291, %s30, 1
        %p293 = scmp.lt.s32.totalorder %s290, 0
        %s294 = scalar_select %p293, %s290, 0
        %s295 = sadd.s32 %s294, %s292
        %s296 = smul.addr %s295, 4
        %s297 = scalar_lea.vmem %s0, %s296
        %s298 = sadd.s32 %s29, %s31
        %p300 = scmp.eq.s32.totalorder %s31, 0
        // Predicated region
        $region41: #{tpu_custom_call.1} parent=39 // pred_check
          %p301 = pneg %p300
        $region42: #{tpu_custom_call.1} parent=39 // pred_check_branch
          %303 = sbr.rel (%p301) target = $region44
        $region43: #{tpu_custom_call.1} parent=39 // pred_region
          %304 = vst [vmem:[%s282] sm:$0xff] 0.0
          %305 = vst [vmem:[%s282 + $0x8] sm:$0xff] 0.0
          %306 = vst [vmem:[%s282 + $0x10] sm:$0xff] 0.0
          %307 = vst [vmem:[%s282 + $0x18] sm:$0xff] 0.0
          %308 = vst [vmem:[%s289] sm:$0xff] -inf
          %309 = vst [vmem:[%s289 + $0x8] sm:$0xff] -inf
          %310 = vst [vmem:[%s289 + $0x10] sm:$0xff] -inf
          %311 = vst [vmem:[%s289 + $0x18] sm:$0xff] -inf
        $region44: #{tpu_custom_call.1} parent=39 // pred_fallthru
          _
        %v312 = vld [vmem:[%s297] sm:$0xf]
        %v313 = vld [vmem:[%s1] sm:$0xff]
        %v314 = vld [vmem:[%s1 + $0x8] sm:$0xff]
        %v315 = vld [vmem:[%s2] sm:$0xff]
        %v316 = vld [vmem:[%s2 + $0x8] sm:$0xff]
        %v317 = vpack.c.bf16 %v314, %v313
        %v318 = vpack.c.bf16 %v312, %v312
        %320 = vset.pattern.permute.xlu0 0
        %321 = vperm.xlu0 %320, %v315
        %v322 = vpop.permute.xlu0 %321
        %325 = vset.pattern.permute.xlu0 0
        %326 = vperm.xlu0 %325, %v316
        %v327 = vpop.permute.xlu0 %326
        %vm329 = vcmask 31744
        %v331 = vsel %vm329, %v317, 0
        %vm333 = vcmask 1041408
        %v335 = vsel %vm333, %v318, 0
        %337 = vmatpush.bf16.msra.mxu0 0
        %338 = vmatpush.bf16.msra.mxu0 0
        %339 = vmatpush.bf16.msra.mxu0 0
        %340 = vmatpush.bf16.msra.mxu0 0
        %341 = vmatpush.bf16.msra.mxu0 0
        %342 = vmatpush.bf16.msra.mxu0 0
        %343 = vmatpush.bf16.msra.mxu0 0
        %344 = vmatpush.bf16.msra.mxu0 %v335
        %345 = vmatmul.bf16.gmra.mxu0 %v331
        %v346 = vpop.f32.mrf.mxu0
        %v347 = vadd.f32 %v322, %v346
        %v348 = vpop.f32.mrf.mxu0
        %v349 = vadd.f32 %v327, %v348
        %350 = vdwg.mxu0
        %v351 = vmul.f32 %v347, 0.2
        %v352 = vmul.f32 %v349, 0.2
        %v353 = vmax.f32 %v347, %v351
        %v354 = vmax.f32 %v349, %v352
        %v355 = vld [vmem:[%s3] sm:$0xff]
        %v356 = vld [vmem:[%s3 + $0x8] sm:$0xff]
        %v357 = vld [vmem:[%s3 + $0x10] sm:$0xff]
        %v358 = vld [vmem:[%s3 + $0x18] sm:$0xff]
        %v359 = vld [vmem:[%s4] sm:$0xff]
        %v360 = vld [vmem:[%s4 + $0x8] sm:$0xff]
        %v361 = vld [vmem:[%s4 + $0x10] sm:$0xff]
        %v362 = vld [vmem:[%s4 + $0x18] sm:$0xff]
        %v363 = vpack.c.bf16 %v356, %v355
        %v364 = vpack.c.bf16 %v358, %v357
        %v365 = vpack.c.bf16 %v354, %v353
        %367 = vset.pattern.permute.xlu0 0
        %368 = vperm.xlu0 %367, %v359
        %v369 = vpop.permute.xlu0 %368
        %372 = vset.pattern.permute.xlu0 0
        %373 = vperm.xlu0 %372, %v360
        %v374 = vpop.permute.xlu0 %373
        %377 = vset.pattern.permute.xlu0 0
        %378 = vperm.xlu0 %377, %v361
        %v379 = vpop.permute.xlu0 %378
        %382 = vset.pattern.permute.xlu0 0
        %383 = vperm.xlu0 %382, %v362
        %v384 = vpop.permute.xlu0 %383
        %vm386 = vcmask 130048
        %v388 = vsel %vm386, %v363, 0
        %v391 = vsel %vm386, %v364, 0
        %393 = vmatpush.bf16.msra.mxu0 0
        %394 = vmatpush.bf16.msra.mxu0 0
        %395 = vmatpush.bf16.msra.mxu0 0
        %396 = vmatpush.bf16.msra.mxu0 0
        %397 = vmatpush.bf16.msra.mxu0 0
        %398 = vmatpush.bf16.msra.mxu0 0
        %399 = vmatpush.bf16.msra.mxu0 0
        %400 = vmatpush.bf16.msra.mxu0 %v365
        %401 = vmatmul.bf16.gmra.mxu0 %v388
        %v402 = vpop.f32.mrf.mxu0
        %v403 = vadd.f32 %v369, %v402
        %v404 = vpop.f32.mrf.mxu0
        %v405 = vadd.f32 %v374, %v404
        %406 = vmatmul.bf16.gmra.mxu0 %v391
        %v407 = vpop.f32.mrf.mxu0
        %v408 = vadd.f32 %v379, %v407
        %v409 = vpop.f32.mrf.mxu0
        %v410 = vadd.f32 %v384, %v409
        %411 = vdwg.mxu0
        %v412 = vmul.f32 %v403, 0.2
        %v413 = vmul.f32 %v405, 0.2
        %v414 = vmul.f32 %v408, 0.2
        %v415 = vmul.f32 %v410, 0.2
        %v416 = vmax.f32 %v403, %v412
        %v417 = vmax.f32 %v405, %v413
        %v418 = vmax.f32 %v408, %v414
        %v419 = vmax.f32 %v410, %v415
        %s420 = sadd.s32 %s29, %s31
        %s421 = sadd.s32 %s420, 1
        %s422 = smul.u32 %s421, 128
        %p423 = scmp.gt.s32.totalorder %s422, 8
        %p424 = scmp.le.s32.totalorder %s422, 8
        // Predicated region
        $region45: #{tpu_custom_call.1} parent=39 // pred_check
          %p425 = pneg %p424
        $region46: #{tpu_custom_call.1} parent=39 // pred_check_branch
          %427 = sbr.rel (%p425) target = $region48
        $region47: #{tpu_custom_call.1} parent=39 // pred_region
          %v428 = vld [vmem:[%s282] sm:$0xff]
          %v429 = vld [vmem:[%s282 + $0x8] sm:$0xff]
          %v430 = vld [vmem:[%s282 + $0x10] sm:$0xff]
          %v431 = vld [vmem:[%s282 + $0x18] sm:$0xff]
          %v432 = vadd.f32 %v428, %v416
          %v433 = vadd.f32 %v429, %v417
          %v434 = vadd.f32 %v430, %v418
          %v435 = vadd.f32 %v431, %v419
          %436 = vst [vmem:[%s282] sm:$0xff] %v432
          %437 = vst [vmem:[%s282 + $0x8] sm:$0xff] %v433
          %438 = vst [vmem:[%s282 + $0x10] sm:$0xff] %v434
          %439 = vst [vmem:[%s282 + $0x18] sm:$0xff] %v435
          %v440 = vld [vmem:[%s289] sm:$0xff]
          %v441 = vld [vmem:[%s289 + $0x8] sm:$0xff]
          %v442 = vld [vmem:[%s289 + $0x10] sm:$0xff]
          %v443 = vld [vmem:[%s289 + $0x18] sm:$0xff]
          %v444 = vmax.f32 %v440, %v416
          %v445 = vmax.f32 %v441, %v417
          %v446 = vmax.f32 %v442, %v418
          %v447 = vmax.f32 %v443, %v419
          %448 = vst [vmem:[%s289] sm:$0xff] %v444
          %449 = vst [vmem:[%s289 + $0x8] sm:$0xff] %v445
          %450 = vst [vmem:[%s289 + $0x10] sm:$0xff] %v446
          %451 = vst [vmem:[%s289 + $0x18] sm:$0xff] %v447
        $region48: #{tpu_custom_call.1} parent=39 // pred_fallthru
          _
        // Predicated region
        $region49: #{tpu_custom_call.1} parent=39 // pred_check
          %p452 = pneg %p423
        $region50: #{tpu_custom_call.1} parent=39 // pred_check_branch
          %454 = sbr.rel (%p452) target = $region52
        $region51: #{tpu_custom_call.1} parent=39 // pred_region
          %s455 = smul.u32 %s420, 128
          %v456 = vlaneseq
          %v457 = vand.u32 %v456, 127
          %v458 = vstv %s455
          %v459 = vadd.s32 %v458, %v457
          %vm460 = vcmp.lt.s32.totalorder %v459, 8
          %v461 = vsel %vm460, 1, 0
          %vm462 = vcmp.eq.s32.totalorder %v461, 1
          %v463 = vsel %vm462, %v416, 0.0
          %v464 = vsel %vm462, %v417, 0.0
          %v465 = vsel %vm462, %v418, 0.0
          %v466 = vsel %vm462, %v419, 0.0
          %v467 = vsel %vm462, %v416, -inf
          %v468 = vsel %vm462, %v417, -inf
          %v469 = vsel %vm462, %v418, -inf
          %v470 = vsel %vm462, %v419, -inf
          %v471 = vld [vmem:[%s282] sm:$0xff]
          %v472 = vld [vmem:[%s282 + $0x8] sm:$0xff]
          %v473 = vld [vmem:[%s282 + $0x10] sm:$0xff]
          %v474 = vld [vmem:[%s282 + $0x18] sm:$0xff]
          %v475 = vadd.f32 %v471, %v463
          %v476 = vadd.f32 %v472, %v464
          %v477 = vadd.f32 %v473, %v465
          %v478 = vadd.f32 %v474, %v466
          %479 = vst [vmem:[%s282] sm:$0xff] %v475
          %480 = vst [vmem:[%s282 + $0x8] sm:$0xff] %v476
          %481 = vst [vmem:[%s282 + $0x10] sm:$0xff] %v477
          %482 = vst [vmem:[%s282 + $0x18] sm:$0xff] %v478
          %v483 = vld [vmem:[%s289] sm:$0xff]
          %v484 = vld [vmem:[%s289 + $0x8] sm:$0xff]
          %v485 = vld [vmem:[%s289 + $0x10] sm:$0xff]
          %v486 = vld [vmem:[%s289 + $0x18] sm:$0xff]
          %v487 = vmax.f32 %v483, %v467
          %v488 = vmax.f32 %v484, %v468
          %v489 = vmax.f32 %v485, %v469
          %v490 = vmax.f32 %v486, %v470
          %491 = vst [vmem:[%s289] sm:$0xff] %v487
          %492 = vst [vmem:[%s289 + $0x8] sm:$0xff] %v488
          %493 = vst [vmem:[%s289 + $0x10] sm:$0xff] %v489
          %494 = vst [vmem:[%s289 + $0x18] sm:$0xff] %v490
        $region52: #{tpu_custom_call.1} parent=39 // pred_fallthru
          _
        %s495 = sand.u32 %s167, 1
        %s496 = scalar_lea.sflag [#allocation3], %s495
        %s497 = sand.u32 %s167, 1
        %s498 = smul.addr %s497, 32
        %s499 = scalar_lea.vmem [#allocation2], %s498
        %s500 = sand.u32 %s195, 1
        %s501 = scalar_lea.sflag [#allocation5], %s500
        %s502 = sand.u32 %s195, 1
        %s503 = smul.addr %s502, 32
        %s504 = scalar_lea.vmem [#allocation4], %s503
        // Predicated region
        $region53: #{tpu_custom_call.1} parent=39 // pred_check
          %p505 = pneg %p177
        $region54: #{tpu_custom_call.1} parent=39 // pred_check_branch
          %507 = sbr.rel (%p505) target = $region56
        $region55: #{tpu_custom_call.1} parent=39 // pred_region
          %509 = vsyncadd %s496, 0
          %s510 = smul.addr %s30, 4
          %s511 = smul.addr %s29, 8
          %s512 = sadd.s32 %s510, %s511
          %s513 = smul.addr %s512, 8
          %s514 = scalar_lea.hbm %s5, %s513
          %s515 = sshll.u32 %s499, 4
          %s516 = int_to_ptr.vmem [resolvable:$true] %s515
          %s517 = sshll.u32 %s514, 4
          %s518 = int_to_ptr.hbm [resolvable:$true] %s517
          %523 = dma.vmem_to_hbm [thread:$0]  %s516, 512, %s518, %s496, 128, 128, 8
        $region56: #{tpu_custom_call.1} parent=39 // pred_fallthru
          _
        // Predicated region
        $region57: #{tpu_custom_call.1} parent=39 // pred_check
          %p524 = pneg %p205
        $region58: #{tpu_custom_call.1} parent=39 // pred_check_branch
          %526 = sbr.rel (%p524) target = $region60
        $region59: #{tpu_custom_call.1} parent=39 // pred_region
          %528 = vsyncadd %s501, 0
          %s529 = smul.addr %s30, 4
          %s530 = smul.addr %s29, 8
          %s531 = sadd.s32 %s529, %s530
          %s532 = smul.addr %s531, 8
          %s533 = scalar_lea.hbm %s6, %s532
          %s534 = sshll.u32 %s504, 4
          %s535 = int_to_ptr.vmem [resolvable:$true] %s534
          %s536 = sshll.u32 %s533, 4
          %s537 = int_to_ptr.hbm [resolvable:$true] %s536
          %542 = dma.vmem_to_hbm [thread:$0]  %s535, 512, %s537, %s501, 128, 128, 8
        $region60: #{tpu_custom_call.1} parent=39 // pred_fallthru
          _
      $region40: #{tpu_custom_call.1} parent=5 // pred_fallthru
        _
      %p543 = scmp.le.s32.totalorder 2, %s19
      // Predicated region
      $region61: #{tpu_custom_call.1} parent=5 // pred_check
        %p544 = pneg %p543
      $region62: #{tpu_custom_call.1} parent=5 // pred_check_branch
        %546 = sbr.rel (%p544) target = $region64
      $region63: #{tpu_custom_call.1} parent=5 // pred_region
        %s547 = ssub.s32 %s19, 2
        // Predicated region
        $region65: #{tpu_custom_call.1} parent=63 // pred_check
          %p548 = pneg %p183
        $region66: #{tpu_custom_call.1} parent=63 // pred_check_branch
          %550 = sbr.rel (%p548) target = $region68
        $region67: #{tpu_custom_call.1} parent=63 // pred_region
          %s551 = sand.u32 %s168, 1
          %s552 = scalar_lea.sflag [#allocation3], %s551
          %s553 = sand.u32 %s168, 1
          %s554 = smul.addr %s553, 32
          %s555 = scalar_lea.vmem [#allocation2], %s554
          %557 = dma.done %s552, 512
        $region68: #{tpu_custom_call.1} parent=63 // pred_fallthru
          _
        // Predicated region
        $region69: #{tpu_custom_call.1} parent=63 // pred_check
          %p558 = pneg %p211
        $region70: #{tpu_custom_call.1} parent=63 // pred_check_branch
          %560 = sbr.rel (%p558) target = $region72
        $region71: #{tpu_custom_call.1} parent=63 // pred_region
          %s561 = sand.u32 %s196, 1
          %s562 = scalar_lea.sflag [#allocation5], %s561
          %s563 = sand.u32 %s196, 1
          %s564 = smul.addr %s563, 32
          %s565 = scalar_lea.vmem [#allocation4], %s564
          %567 = dma.done %s562, 512
        $region72: #{tpu_custom_call.1} parent=63 // pred_fallthru
          _
      $region64: #{tpu_custom_call.1} parent=5 // pred_fallthru
        _
    $region6: #{tpu_custom_call.1} parent=1 // loop_footer
      %s23 = sadd.s32 1, %s19
    $region7: #{tpu_custom_call.1} parent=1 // loop_footer_branch
      %18 = sbr.rel target = $region3
    $region8: #{tpu_custom_call.1} parent=1 // loop_exit
      _
    %568 = vsyncpa [#allocation3], 1
    %s569 = scalar_lea.sflag [#allocation3], 1
    %570 = vsyncpa %s569, 1
    %571 = vsyncpa [#allocation5], 1
    %s572 = scalar_lea.sflag [#allocation5], 1
    %573 = vsyncpa %s572, 1

</llo_original>
